<compile_context>
chip_gen: v7x
topology: tpu7x:2x2x1
jax: 0.10.0
libtpu: 0.0.40
codegen_flags: <defaults>
</compile_context>

<pallas_src>
import math

import jax
import jax.numpy as jnp
from jax.experimental import pallas as pl
from jax.experimental.pallas import tpu as pltpu


_LANE_CANDIDATES = (2048, 1024, 512, 256, 128)
_TARGET_TILE_BYTES = 2 * 1024 * 1024  # ~2 MiB/buffer: safe on v5e/v6e/v7x defaults.


def _choose_layout(total, itemsize):
    """Pick a lane-dense (rows, lanes) slab + per-grid-step tile_rows."""
    lanes = rows = None
    pad = 0
    for cand in _LANE_CANDIDATES:
        if total % cand == 0 and (total // cand) % 8 == 0:
            lanes = cand
            rows = total // cand
            break
    if lanes is None:
        # Fall back: zero-pad the flat array up to a multiple of (8, 128).
        lanes = 128
        chunk = 8 * lanes
        padded = ((total + chunk - 1) // chunk) * chunk
        pad = padded - total
        rows = padded // lanes

    # Largest tile_rows that is a multiple of 8, divides rows, and keeps the
    # tile under ~2 MiB.
    cap = max(8, (_TARGET_TILE_BYTES // (itemsize * lanes)) // 8 * 8)
    tile_rows = 8
    for t in range(min(rows, cap), 7, -1):
        if t % 8 == 0 and rows % t == 0:
            tile_rows = t
            break
    return rows, lanes, tile_rows, pad


def _partial_sum_kernel(x_ref, sum_ref):
    # (1,1) f32 output stays resident across the reduction grid axis.
    @pl.when(pl.program_id(0) == 0)
    def _():
        sum_ref[...] = jnp.zeros_like(sum_ref)

    sum_ref[...] += jnp.sum(x_ref[...].astype(jnp.float32))


def _subtract_kernel(mean_ref, x_ref, o_ref):
    mean = mean_ref[0, 0]  # scalar read from SMEM, broadcast on the VPU
    o_ref[...] = (x_ref[...].astype(jnp.float32) - mean).astype(o_ref.dtype)


def center_layer(x):
    """x - x.mean() over ALL elements (matches torch's tensor.mean())."""
    # NOTE: for tiny tensors a plain `x - jnp.mean(x)` is competitive (launch
    # overhead dominates); we always take the Pallas path here so the kernel
    # is exercised.
    orig_shape = x.shape
    total = math.prod(orig_shape)
    rows, lanes, tile_rows, pad = _choose_layout(total, jnp.dtype(x.dtype).itemsize)

    flat = x.reshape(-1)
    if pad:
        flat = jnp.pad(flat, (0, pad))
    x2d = flat.reshape(rows, lanes)
    n_tiles = rows // tile_rows

    # ---- Pass 1: tiled partial-sum reduction (f32 accumulator). --------------
    sum2d = pl.pallas_call(
        _partial_sum_kernel,
        out_shape=jax.ShapeDtypeStruct((1, 1), jnp.float32),
        grid=(n_tiles,),
        in_specs=[pl.BlockSpec((tile_rows, lanes), lambda i: (i, 0))],
        out_specs=pl.BlockSpec((1, 1), lambda i: (0, 0)),
        compiler_params=pltpu.CompilerParams(
            dimension_semantics=("arbitrary",)),
    )(x2d)

    mean2d = sum2d / jnp.float32(total)  # (1,1) f32 global mean (tiny XLA op)

    # ---- Pass 2: tiled subtract; scalar mean delivered via SMEM. -------------
    # (input_output_aliases={1: 0} could reuse x's HBM buffer when the caller
    #  allows in-place semantics; left off because x is reused here.)
    out2d = pl.pallas_call(
        _subtract_kernel,
        out_shape=jax.ShapeDtypeStruct((rows, lanes), x.dtype),
        grid=(n_tiles,),
        in_specs=[
            pl.BlockSpec(memory_space=pltpu.MemorySpace.SMEM),   # mean scalar
            pl.BlockSpec((tile_rows, lanes), lambda i: (i, 0)),  # x tile
        ],
        out_specs=pl.BlockSpec((tile_rows, lanes), lambda i: (i, 0)),
        compiler_params=pltpu.CompilerParams(
            dimension_semantics=("parallel",)),
    )(mean2d, x2d)

    out = out2d.reshape(-1)
    if pad:
        out = out[:total]
    return out.reshape(orig_shape)


if __name__ == "__main__":
    key = jax.random.PRNGKey(0)
    x = jax.random.normal(key, (2, 4, 16, 16), dtype=jnp.float32)

    out = center_layer(x)
    out = jax.block_until_ready(out)

    # Reference check in plain JAX (same semantics as torch: global mean).
    ref = x - jnp.mean(x)
    assert out.shape == x.shape and out.dtype == x.dtype
    assert jnp.allclose(out, ref, atol=1e-5, rtol=1e-5)

    print("KERNEL_OK")
</pallas_src>

<mosaic_0001>
module attributes {stable_mosaic.version = 11 : i64} {
  func.func @_partial_sum_kernel(%arg0: i32, %arg1: memref<8x256xf32, #tpu.memory_space<vmem>>, %arg2: memref<1x1xf32, #tpu.memory_space<vmem>>) attributes {dimension_semantics = [#tpu.dimension_semantics<arbitrary>], iteration_bounds = array<i64: 1>, scalar_prefetch = 0 : i64, scratch_operands = 0 : i64, tpu.core_type = #tpu.core_type<tc>, window_params = [{transform_indices = @transform_0, window_bounds = array<i64: 8, 256>}, {pipeline_mode = #tpu.pipeline_mode<synchronous>, transform_indices = @transform_1, window_bounds = array<i64: 1, 1>}]} {
    %c0_i32 = arith.constant 0 : i32
    %0 = arith.cmpi eq, %arg0, %c0_i32 : i32
    %1 = arith.extui %0 : i1 to i32
    %c0_i32_0 = arith.constant 0 : i32
    %2 = arith.cmpi ne, %1, %c0_i32_0 : i32
    scf.if %2 {
      %cst_6 = arith.constant 0.000000e+00 : f32
      %12 = vector.broadcast %cst_6 : f32 to vector<1x1xf32>
      %c0_7 = arith.constant 0 : index
      %c0_8 = arith.constant 0 : index
      %13 = vector.load %arg2[%c0_7, %c0_8] : memref<1x1xf32, #tpu.memory_space<vmem>>, vector<1x1xf32>
      tpu.vector_store %arg2[%c0_7, %c0_8], %12 {strides = array<i32>} : memref<1x1xf32, #tpu.memory_space<vmem>>, vector<1x1xf32>,
    } else {
    }
    %c0 = arith.constant 0 : index
    %c0_1 = arith.constant 0 : index
    %3 = vector.load %arg2[%c0, %c0_1] : memref<1x1xf32, #tpu.memory_space<vmem>>, vector<1x1xf32>
    %c0_2 = arith.constant 0 : index
    %c0_3 = arith.constant 0 : index
    %4 = vector.load %arg1[%c0_2, %c0_3] : memref<8x256xf32, #tpu.memory_space<vmem>>, vector<8x256xf32>
    %5 = vector.shape_cast %4 : vector<8x256xf32> to vector<1x8x256xf32>
    %cst = arith.constant dense<0.000000e+00> : vector<1xf32>
    %6 = vector.multi_reduction <add>, %5, %cst [1, 2] : vector<1x8x256xf32> to vector<1xf32>
    %7 = vector.shape_cast %6 : vector<1xf32> to vector<1x1x1xf32>
    %8 = vector.extract %7[0, 0, 0] : f32 from vector<1x1x1xf32>
    %9 = vector.broadcast %8 : f32 to vector<1x1xf32>
    %10 = arith.addf %3, %9 : vector<1x1xf32>
    %c0_4 = arith.constant 0 : index
    %c0_5 = arith.constant 0 : index
    %11 = vector.load %arg2[%c0_4, %c0_5] : memref<1x1xf32, #tpu.memory_space<vmem>>, vector<1x1xf32>
    tpu.vector_store %arg2[%c0_4, %c0_5], %10 {strides = array<i32>} : memref<1x1xf32, #tpu.memory_space<vmem>>, vector<1x1xf32>,
    return
  }
  func.func @transform_0(%arg0: i32) -> (i32, i32) {
    %c0_i32 = arith.constant 0 : i32
    %c0_i32_0 = arith.constant 0 : i32
    return %arg0, %c0_i32 : i32, i32
  }
  func.func @transform_1(%arg0: i32) -> (i32, i32) {
    %c0_i32 = arith.constant 0 : i32
    %c0_i32_0 = arith.constant 0 : i32
    %c0_i32_1 = arith.constant 0 : i32
    return %c0_i32, %c0_i32_0 : i32, i32
  }
}

</mosaic_0001>

<llo_original>
// kernel: tpu_custom_call.1
$region0: #{tpu_custom_call.1}
  #allocation0 [shape = 'u32[]', space=smem, size = 0x4, offset = 0x4, fixed_abs, tag = 'smem constant byte address 0x4 - core index']
  #allocation1 [shape = 'u32[144,128]{1,0:T(1,128)}', space=vmem, size = 0x12000, scoped, tag = 'internal scratch']
  %s0 = inlined_call_operand.hbm [shape: f32[8,256], index: 0, kind: input, shape index: {}]
  %s1 = inlined_call_operand.hbm [shape: f32[1,1], index: 1, kind: output, shape index: {}]
  %s2 = sld [smem:[#allocation0]]
  $region22: #{tpu_custom_call.1} parent=0
    _
  %s4 = ssub.s32 1, %s2
  %s5 = scalar_select 0, %s4, %s2
  $region1: #{tpu_custom_call.1} parent=0
    #allocation2 [shape = 'u8[8192]{0}', space=vmem, size = 0x2000, scoped, tag = 'input window, operand 0, single buffered']
    #allocation3 [shape = 's32[1]{0}', space=sflag, size = 0x4, scoped, tag = 'scoped memory for tpu_custom_call.1']
    #allocation4 [shape = 's32[1]{0}', space=sflag, size = 0x4, scoped, tag = 'scoped memory for tpu_custom_call.1']
    #allocation5 [shape = 'u8[512]{0}', space=vmem, size = 0x400, scoped, tag = 'output window, operand 0, single buffered']
    %6 = vsyncpa [#allocation3], 0
    %7 = vsyncpa [#allocation4], 0
    // Predicated region
    $region2: #{tpu_custom_call.1} parent=1 // pred_check
      _
    $region3: #{tpu_custom_call.1} parent=1 // pred_check_branch
      %9 = sbr.rel (0) target = $region5
    $region4: #{tpu_custom_call.1} parent=1 // pred_region
      %s11 = ssub.s32 256, 256
      %12 = vsyncadd [#allocation3], %s11
      %s14 = sshll.u32 [#allocation2], 4
      %s15 = int_to_ptr.vmem [resolvable:$true] %s14
      %17 = dma.hbm_to_vmem [thread:$0]  %s0, 256, %s15, [#allocation3]
    $region5: #{tpu_custom_call.1} parent=1 // pred_fallthru
      _
    // Predicated region
    $region6: #{tpu_custom_call.1} parent=1 // pred_check
      _
    $region7: #{tpu_custom_call.1} parent=1 // pred_check_branch
      %19 = sbr.rel (0) target = $region9
    $region8: #{tpu_custom_call.1} parent=1 // pred_region
      %20 = dma.done [#allocation3], 256
    $region9: #{tpu_custom_call.1} parent=1 // pred_fallthru
      _
    %p21 = scmp.eq.s32.totalorder 0, 0
    // Predicated region
    $region10: #{tpu_custom_call.1} parent=1 // pred_check
      %p22 = pneg %p21
    $region11: #{tpu_custom_call.1} parent=1 // pred_check_branch
      %24 = sbr.rel (%p22) target = $region13
    $region12: #{tpu_custom_call.1} parent=1 // pred_region
      %vm25 = vcmask 0
      %26 = vst.msk [vmem:[#allocation5] sm:$0x1] %vm25, 0.0
    $region13: #{tpu_custom_call.1} parent=1 // pred_fallthru
      _
    %v27 = vld [vmem:[#allocation5] sm:$0x1]
    %v28 = vld [vmem:[#allocation2] sm:$0xff]
    %v29 = vld [vmem:[#allocation2 + $0x8] sm:$0xff]
    %v30 = vadd.f32 %v28, %v29
    %31 = vadd.xlane.f32.xlu0 %v30
    %v32 = vpop.xlane.xlu0 %31
    %v33 = vrot.slane %v32, 4
    %v34 = vadd.f32 %v32, %v33
    %v35 = vrot.slane %v34, 2
    %v36 = vadd.f32 %v34, %v35
    %v37 = vrot.slane %v36, 1
    %v38 = vadd.f32 %v36, %v37
    %s39 = vtos %v38
    %v40 = vstv %s39
    %v41 = vadd.f32 %v27, %v40
    %vm42 = vcmask 0
    %43 = vst.msk [vmem:[#allocation5] sm:$0x1] %vm42, %v41
    // Predicated region
    $region14: #{tpu_custom_call.1} parent=1 // pred_check
      _
    $region15: #{tpu_custom_call.1} parent=1 // pred_check_branch
      %45 = sbr.rel (0) target = $region17
    $region16: #{tpu_custom_call.1} parent=1 // pred_region
      %s47 = ssub.s32 16, 16
      %48 = vsyncadd [#allocation4], %s47
      %s50 = sshll.u32 [#allocation5], 4
      %s51 = int_to_ptr.vmem [resolvable:$true] %s50
      %53 = dma.vmem_to_hbm [thread:$0]  %s51, 16, %s1, [#allocation4]
    $region17: #{tpu_custom_call.1} parent=1 // pred_fallthru
      _
    // Predicated region
    $region18: #{tpu_custom_call.1} parent=1 // pred_check
      _
    $region19: #{tpu_custom_call.1} parent=1 // pred_check_branch
      %55 = sbr.rel (0) target = $region21
    $region20: #{tpu_custom_call.1} parent=1 // pred_region
      %56 = dma.done [#allocation4], 16
    $region21: #{tpu_custom_call.1} parent=1 // pred_fallthru
      _
    %57 = vsyncpa [#allocation3], 1
    %58 = vsyncpa [#allocation4], 1

</llo_original>
